<compile_context>
chip_gen: v6e
topology: v6e:2x2x1
jax: 0.10.0
libtpu: 0.0.40
codegen_flags: <defaults>
</compile_context>

<pallas_src>
import jax
import jax.numpy as jnp
from jax.experimental import pallas as pl
from jax.experimental.pallas import tpu as pltpu


def _headnet_kernel(x_ref, w_ref, o_ref):
    # x_ref: (TB, K)  batch tile of the input, VMEM.
    # w_ref: (N, K)   full weight, PyTorch layout [out_features, in_features].
    # o_ref: (TB, N)  output tile.
    x = x_ref[...].astype(jnp.float32)          # (TB, K)
    w = w_ref[...].astype(jnp.float32)          # (N, K)
    # VPU multiply + XLU reduce over the contraction dim.  The PyTorch-layout
    # "transpose" is folded into the contraction — no MXU, no weight.T.
    prod = x[:, None, :] * w[None, :, :]        # (TB, N, K)
    o_ref[...] = jnp.sum(prod, axis=-1).astype(o_ref.dtype)


def headnet_forward(x, weight, *, block_batch=512):
    """x: [B, 10] float32, weight: [n_actions, 10] float32 (PyTorch layout)."""
    B, K = x.shape
    N, K2 = weight.shape
    assert K == K2

    # Choose the batch tile: whole batch if small, else `block_batch` rows per
    # grid step (pad B up to a multiple so blocks tile exactly).
    if B <= block_batch:
        TB = B
        xp = x
    else:
        TB = block_batch
        pad = (-B) % TB
        xp = jnp.pad(x, ((0, pad), (0, 0))) if pad else x
    Bp = xp.shape[0]
    grid = (Bp // TB,)

    out = pl.pallas_call(
        _headnet_kernel,
        out_shape=jax.ShapeDtypeStruct((Bp, N), x.dtype),
        grid_spec=pl.GridSpec(
            grid=grid,
            in_specs=[
                # Block shapes either equal the full array dims or keep the
                # second-to-last dim a multiple of 8, so the (8,128) tiling
                # constraint is satisfied.
                pl.BlockSpec((TB, K), lambda i: (i, 0)),
                pl.BlockSpec((N, K), lambda i: (0, 0)),
            ],
            out_specs=pl.BlockSpec((TB, N), lambda i: (i, 0)),
        ),
        compiler_params=pltpu.CompilerParams(
            dimension_semantics=("parallel",)
        ),
    )(xp, weight)

    return out[:B] if Bp != B else out


if __name__ == "__main__":
    n_actions = 4
    in_features = 10
    batch = 8

    key = jax.random.PRNGKey(0)
    kx, kw = jax.random.split(key)

    # Deterministic parameter init (nn.Linear(10, n_actions, bias=False):
    # shape [n_actions, in_features], uniform(-1/sqrt(10), 1/sqrt(10))).
    bound = 1.0 / (in_features ** 0.5)
    weight = jax.random.uniform(
        kw, (n_actions, in_features), dtype=jnp.float32, minval=-bound, maxval=bound
    )
    x = jax.random.normal(kx, (batch, in_features), dtype=jnp.float32)

    out = headnet_forward(x, weight)
    out = jax.block_until_ready(out)

    # Reference check against plain JAX (x @ W^T, same as PyTorch Linear).
    ref = x @ weight.T
    assert out.shape == (batch, n_actions)
    assert jnp.allclose(out, ref, atol=1e-5, rtol=1e-5)

    print("KERNEL_OK")
</pallas_src>

<mosaic_0001>
module attributes {stable_mosaic.version = 11 : i64} {
  func.func @_headnet_kernel(%arg0: i32, %arg1: memref<8x10xf32, #tpu.memory_space<vmem>>, %arg2: memref<4x10xf32, #tpu.memory_space<vmem>>, %arg3: memref<8x4xf32, #tpu.memory_space<vmem>>) attributes {dimension_semantics = [#tpu.dimension_semantics<parallel>], iteration_bounds = array<i64: 1>, scalar_prefetch = 0 : i64, scratch_operands = 0 : i64, tpu.core_type = #tpu.core_type<tc>, window_params = [{transform_indices = @transform_0, window_bounds = array<i64: 8, 10>}, {pipeline_mode = #tpu.pipeline_mode<synchronous>, transform_indices = @transform_1, window_bounds = array<i64: 4, 10>}, {transform_indices = @transform_2, window_bounds = array<i64: 8, 4>}]} {
    %c0 = arith.constant 0 : index
    %c0_0 = arith.constant 0 : index
    %0 = vector.load %arg1[%c0, %c0_0] : memref<8x10xf32, #tpu.memory_space<vmem>>, vector<8x10xf32>
    %c0_1 = arith.constant 0 : index
    %c0_2 = arith.constant 0 : index
    %1 = vector.load %arg2[%c0_1, %c0_2] : memref<4x10xf32, #tpu.memory_space<vmem>>, vector<4x10xf32>
    %2 = vector.shape_cast %0 : vector<8x10xf32> to vector<8x1x10xf32>
    %3 = vector.shape_cast %1 : vector<4x10xf32> to vector<1x4x10xf32>
    %4 = vector.broadcast %2 : vector<8x1x10xf32> to vector<8x4x10xf32>
    %5 = vector.broadcast %3 : vector<1x4x10xf32> to vector<8x4x10xf32>
    %6 = arith.mulf %4, %5 : vector<8x4x10xf32>
    %cst = arith.constant dense<0.000000e+00> : vector<8x4xf32>
    %7 = vector.multi_reduction <add>, %6, %cst [2] : vector<8x4x10xf32> to vector<8x4xf32>
    %c0_3 = arith.constant 0 : index
    %c0_4 = arith.constant 0 : index
    %8 = vector.load %arg3[%c0_3, %c0_4] : memref<8x4xf32, #tpu.memory_space<vmem>>, vector<8x4xf32>
    tpu.vector_store %arg3[%c0_3, %c0_4], %7 {strides = array<i32>} : memref<8x4xf32, #tpu.memory_space<vmem>>, vector<8x4xf32>,
    return
  }
  func.func @transform_0(%arg0: i32) -> (i32, i32) {
    %c0_i32 = arith.constant 0 : i32
    %c0_i32_0 = arith.constant 0 : i32
    return %arg0, %c0_i32 : i32, i32
  }
  func.func @transform_1(%arg0: i32) -> (i32, i32) {
    %c0_i32 = arith.constant 0 : i32
    %c0_i32_0 = arith.constant 0 : i32
    %c0_i32_1 = arith.constant 0 : i32
    return %c0_i32, %c0_i32_0 : i32, i32
  }
  func.func @transform_2(%arg0: i32) -> (i32, i32) {
    %c0_i32 = arith.constant 0 : i32
    %c0_i32_0 = arith.constant 0 : i32
    return %arg0, %c0_i32 : i32, i32
  }
}

</mosaic_0001>

<llo_original>
// kernel: tpu_custom_call.1
$region0: #{tpu_custom_call.1}
  #allocation0 [shape = 'u32[]', space=smem, size = 0x4, offset = 0x4, fixed_abs, tag = 'smem constant byte address 0x4 - core index']
  #allocation1 [shape = 'u32[144,128]{1,0:T(1,128)}', space=vmem, size = 0x12000, scoped, tag = 'internal scratch']
  %s0 = inlined_call_operand.hbm [shape: f32[8,10], index: 0, kind: input, shape index: {}]
  %s1 = inlined_call_operand.hbm [shape: f32[4,10], index: 1, kind: input, shape index: {}]
  %s2 = inlined_call_operand.vmem [shape: f32[8,4], index: 2, kind: output, shape index: {}]
  %s3 = sld [smem:[#allocation0]]
  $region26: #{tpu_custom_call.1} parent=0
    _
  %s5 = ssub.s32 1, %s3
  %s6 = scalar_select 0, %s5, %s3
  $region1: #{tpu_custom_call.1} parent=0
    #allocation2 [shape = 'u8[4096]{0}', space=vmem, size = 0x1000, scoped, tag = 'input window, operand 0, single buffered']
    #allocation3 [shape = 's32[1]{0}', space=sflag, size = 0x4, scoped, tag = 'scoped memory for tpu_custom_call.1']
    #allocation4 [shape = 'u8[2048]{0}', space=vmem, size = 0x800, scoped, tag = 'input window, operand 1, single buffered']
    #allocation5 [shape = 's32[1]{0}', space=sflag, size = 0x4, scoped, tag = 'scoped memory for tpu_custom_call.1']
    %7 = vsyncpa [#allocation3], 0
    %8 = vsyncpa [#allocation5], 0
    // Predicated region
    $region2: #{tpu_custom_call.1} parent=1 // pred_check
      _
    $region3: #{tpu_custom_call.1} parent=1 // pred_check_branch
      %10 = sbr.rel (0) target = $region5
    $region4: #{tpu_custom_call.1} parent=1 // pred_region
      %s12 = ssub.s32 128, 128
      %13 = vsyncadd [#allocation3], %s12
      %s15 = sshll.u32 [#allocation2], 4
      %s16 = int_to_ptr.vmem [resolvable:$true] %s15
      %18 = dma.hbm_to_vmem [thread:$0]  %s0, 128, %s16, [#allocation3]
    $region5: #{tpu_custom_call.1} parent=1 // pred_fallthru
      _
    // Predicated region
    $region6: #{tpu_custom_call.1} parent=1 // pred_check
      _
    $region7: #{tpu_custom_call.1} parent=1 // pred_check_branch
      %20 = sbr.rel (0) target = $region9
    $region8: #{tpu_custom_call.1} parent=1 // pred_region
      %s22 = ssub.s32 64, 64
      %23 = vsyncadd [#allocation5], %s22
      %s25 = sshll.u32 [#allocation4], 4
      %s26 = int_to_ptr.vmem [resolvable:$true] %s25
      %28 = dma.hbm_to_vmem [thread:$0]  %s1, 64, %s26, [#allocation5]
    $region9: #{tpu_custom_call.1} parent=1 // pred_fallthru
      _
    // Predicated region
    $region10: #{tpu_custom_call.1} parent=1 // pred_check
      _
    $region11: #{tpu_custom_call.1} parent=1 // pred_check_branch
      %30 = sbr.rel (0) target = $region13
    $region12: #{tpu_custom_call.1} parent=1 // pred_region
      %31 = dma.done [#allocation3], 128
    $region13: #{tpu_custom_call.1} parent=1 // pred_fallthru
      _
    // Predicated region
    $region14: #{tpu_custom_call.1} parent=1 // pred_check
      _
    $region15: #{tpu_custom_call.1} parent=1 // pred_check_branch
      %33 = sbr.rel (0) target = $region17
    $region16: #{tpu_custom_call.1} parent=1 // pred_region
      %34 = dma.done [#allocation5], 64
    $region17: #{tpu_custom_call.1} parent=1 // pred_fallthru
      _
    %v35 = vld [vmem:[#allocation2] sm:$0xff]
    %v36 = vld [vmem:[#allocation4] sm:$0xf]
    %v38 = vcombine.high %v35, %v35
    %v40 = vunpack.c.l.s4 1966171168
    %v41 = vunpack.c.0.s8 %v40
    %v42 = vlaneseq
    %v43 = vshrl.u32 %v42, 7
    %v44 = vsub.s32 %v41, %v43
    %v45 = vrot.slane %v35, %v44
    %v47 = vunpack.c.l.s4 1966171168
    %v48 = vunpack.c.0.s8 %v47
    %v49 = vlaneseq
    %v50 = vshrl.u32 %v49, 7
    %v51 = vsub.s32 %v48, %v50
    %v52 = vrot.slane %v38, %v51
    %v53 = vcombine.high %v45, %v45
    %v54 = vcombine.high %v52, %v52
    %v56 = vunpack.c.l.s4 1966171168
    %v57 = vunpack.c.0.s8 %v56
    %v58 = vlaneseq
    %v59 = vshrl.u32 %v58, 7
    %v60 = vsub.s32 %v57, %v59
    %v61 = vrot.slane %v45, %v60
    %v63 = vunpack.c.l.s4 1966171168
    %v64 = vunpack.c.0.s8 %v63
    %v65 = vlaneseq
    %v66 = vshrl.u32 %v65, 7
    %v67 = vsub.s32 %v64, %v66
    %v68 = vrot.slane %v52, %v67
    %v70 = vunpack.c.l.s4 1966171168
    %v71 = vunpack.c.0.s8 %v70
    %v72 = vlaneseq
    %v73 = vshrl.u32 %v72, 7
    %v74 = vsub.s32 %v71, %v73
    %v75 = vrot.slane %v53, %v74
    %v77 = vunpack.c.l.s4 1966171168
    %v78 = vunpack.c.0.s8 %v77
    %v79 = vlaneseq
    %v80 = vshrl.u32 %v79, 7
    %v81 = vsub.s32 %v78, %v80
    %v82 = vrot.slane %v54, %v81
    %v83 = vcombine.high %v61, %v61
    %v84 = vcombine.high %v68, %v68
    %v85 = vcombine.high %v75, %v75
    %v86 = vcombine.high %v82, %v82
    %v87 = vlaneseq
    %v88 = vshrl.u32 %v87, 7
    %v89 = vsub.s32 0, %v88
    %v90 = vrot.slane %v61, %v89
    %v91 = vlaneseq
    %v92 = vshrl.u32 %v91, 7
    %v93 = vsub.s32 0, %v92
    %v94 = vrot.slane %v75, %v93
    %v95 = vlaneseq
    %v96 = vshrl.u32 %v95, 7
    %v97 = vsub.s32 0, %v96
    %v98 = vrot.slane %v83, %v97
    %v99 = vlaneseq
    %v100 = vshrl.u32 %v99, 7
    %v101 = vsub.s32 0, %v100
    %v102 = vrot.slane %v85, %v101
    %v103 = vlaneseq
    %v104 = vshrl.u32 %v103, 7
    %v105 = vsub.s32 0, %v104
    %v106 = vrot.slane %v68, %v105
    %v107 = vlaneseq
    %v108 = vshrl.u32 %v107, 7
    %v109 = vsub.s32 0, %v108
    %v110 = vrot.slane %v82, %v109
    %v111 = vlaneseq
    %v112 = vshrl.u32 %v111, 7
    %v113 = vsub.s32 0, %v112
    %v114 = vrot.slane %v84, %v113
    %v115 = vlaneseq
    %v116 = vshrl.u32 %v115, 7
    %v117 = vsub.s32 0, %v116
    %v118 = vrot.slane %v86, %v117
    %v127 = vmul.f32 %v90, %v36
    %v128 = vmul.f32 %v94, %v36
    %v129 = vmul.f32 %v98, %v36
    %v130 = vmul.f32 %v102, %v36
    %v131 = vmul.f32 %v106, %v36
    %v132 = vmul.f32 %v110, %v36
    %v133 = vmul.f32 %v114, %v36
    %v134 = vmul.f32 %v118, %v36
    %vm135 = vcmask 76800
    %v136 = vsel %vm135, %v127, 0.0
    %137 = vadd.xlane.f32.xlu0 %v136
    %v138 = vpop.xlane.xlu0 %137
    %v139 = vsel %vm135, %v128, 0.0
    %140 = vadd.xlane.f32.xlu0 %v139
    %v141 = vpop.xlane.xlu0 %140
    %v142 = vsel %vm135, %v129, 0.0
    %143 = vadd.xlane.f32.xlu0 %v142
    %v144 = vpop.xlane.xlu0 %143
    %v145 = vsel %vm135, %v130, 0.0
    %146 = vadd.xlane.f32.xlu0 %v145
    %v147 = vpop.xlane.xlu0 %146
    %v148 = vsel %vm135, %v131, 0.0
    %149 = vadd.xlane.f32.xlu0 %v148
    %v150 = vpop.xlane.xlu0 %149
    %v151 = vsel %vm135, %v132, 0.0
    %152 = vadd.xlane.f32.xlu0 %v151
    %v153 = vpop.xlane.xlu0 %152
    %v154 = vsel %vm135, %v133, 0.0
    %155 = vadd.xlane.f32.xlu0 %v154
    %v156 = vpop.xlane.xlu0 %155
    %v157 = vsel %vm135, %v134, 0.0
    %158 = vadd.xlane.f32.xlu0 %v157
    %v159 = vpop.xlane.xlu0 %158
    %v168 = vlaneseq
    %v169 = vand.u32 %v168, 127
    %v170 = vlaneseq
    %v171 = vshrl.u32 %v170, 7
    %v172 = vsub.s32 %v169, %v171
    %v173 = vrot.slane %v138, %v172
    %v174 = vlaneseq
    %v175 = vshrl.u32 %v174, 7
    %v176 = vsub.s32 %v169, %v175
    %v177 = vrot.slane %v141, %v176
    %v178 = vlaneseq
    %v179 = vshrl.u32 %v178, 7
    %v180 = vsub.s32 %v169, %v179
    %v181 = vrot.slane %v144, %v180
    %v182 = vlaneseq
    %v183 = vshrl.u32 %v182, 7
    %v184 = vsub.s32 %v169, %v183
    %v185 = vrot.slane %v147, %v184
    %v186 = vlaneseq
    %v187 = vshrl.u32 %v186, 7
    %v188 = vsub.s32 %v169, %v187
    %v189 = vrot.slane %v150, %v188
    %v190 = vlaneseq
    %v191 = vshrl.u32 %v190, 7
    %v192 = vsub.s32 %v169, %v191
    %v193 = vrot.slane %v153, %v192
    %v194 = vlaneseq
    %v195 = vshrl.u32 %v194, 7
    %v196 = vsub.s32 %v169, %v195
    %v197 = vrot.slane %v156, %v196
    %v198 = vlaneseq
    %v199 = vshrl.u32 %v198, 7
    %v200 = vsub.s32 %v169, %v199
    %v201 = vrot.slane %v159, %v200
    %vm202 = vcmask 1041409
    %v203 = vsel %vm202, %v177, %v173
    %vm204 = vcmask 1042434
    %v205 = vsel %vm204, %v181, %v203
    %vm206 = vcmask 1043459
    %v207 = vsel %vm206, %v185, %v205
    %vm208 = vcmask 1044484
    %v209 = vsel %vm208, %v189, %v207
    %vm210 = vcmask 1045509
    %v211 = vsel %vm210, %v193, %v209
    %vm212 = vcmask 1046534
    %v213 = vsel %vm212, %v197, %v211
    %vm214 = vcmask 1047559
    %v215 = vsel %vm214, %v201, %v213
    %vm217 = vcmask 31744
    %218 = vst.msk [vmem:[%s2] sm:$0xff] %vm217, %v215
    // Predicated region
    $region18: #{tpu_custom_call.1} parent=1 // pred_check
      _
    $region19: #{tpu_custom_call.1} parent=1 // pred_check_branch
      %220 = sbr.rel (0) target = $region21
    $region20: #{tpu_custom_call.1} parent=1 // pred_region
      _
    $region21: #{tpu_custom_call.1} parent=1 // pred_fallthru
      _
    // Predicated region
    $region22: #{tpu_custom_call.1} parent=1 // pred_check
      _
    $region23: #{tpu_custom_call.1} parent=1 // pred_check_branch
      %222 = sbr.rel (0) target = $region25
    $region24: #{tpu_custom_call.1} parent=1 // pred_region
      _
    $region25: #{tpu_custom_call.1} parent=1 // pred_fallthru
      _
    %223 = vsyncpa [#allocation3], 1
    %224 = vsyncpa [#allocation5], 1

</llo_original>
